<compile_context>
chip_gen: v6e
topology: v6e:2x2x1
jax: 0.10.0
libtpu: 0.0.40
codegen_flags: <defaults>
</compile_context>

<pallas_src>
import functools

import jax
import jax.numpy as jnp
from jax import lax
from jax.experimental import pallas as pl
from jax.experimental.pallas import tpu as pltpu


def _dpcb_kernel(x_ref, w1_ref, dw_ref, mask_ref, dwb_ref, w2_ref, out_ref,
                 *, ksize, W, P):
    """Single grid step, whole (batch-folded) problem in registers.

    x_ref    : (B*nf, P)        input; (batch,channel) on sublanes, pixels on lanes
    w1_ref   : (B*hidden, B*nf) block-diagonal 1x1 expand weights
    dw_ref   : (B*hidden, k*k)  per-row depthwise tap weights
    mask_ref : (k*k, P)         channel/batch-independent zero-pad validity mask
    dwb_ref  : (B*hidden, 1)    depthwise bias (tiled over batch)
    w2_ref   : (B*nf, B*hidden) block-diagonal 1x1 project weights
    out_ref  : (B*nf, P)        output
    """
    x = x_ref[...]                                   # (B*nf, P) float32
    w1 = w1_ref[...]                                 # (B*hidden, B*nf)
    bnf = x.shape[0]
    pad = ksize // 2

    # ---- 1x1 expand + LeakyReLU(0.5): B*nf broadcast-FMAs on the VPU --------
    h = x[0:1, :] * w1[:, 0:1]                       # (1,P)*(BH,1) -> (BH,P)
    for r in range(1, bnf):
        h = h + x[r:r + 1, :] * w1[:, r:r + 1]
    h = jnp.where(h >= 0, h, 0.5 * h)                # (B*hidden, P), lane-dense

    # ---- depthwise k x k: static lane rolls (XLU) + mask*tap FMAs (VPU) -----
    # Output pixel p = r*W + c, tap (ky,kx): source pixel index p + d with
    # d = (ky-pad)*W + (kx-pad).  Rolling by -d brings the source onto lane p;
    # wrap-around / out-of-image lanes are zeroed by the validity mask.
    dw = dw_ref[...]                                 # (B*hidden, k*k)
    mask = mask_ref[...]                             # (k*k, P)
    tc = pad * ksize + pad                           # center tap: valid everywhere
    acc = h * dw[:, tc:tc + 1] + dwb_ref[...]        # seed: center tap + bias
    for ky in range(ksize):
        for kx in range(ksize):
            t = ky * ksize + kx
            if t == tc:
                continue
            d = (ky - pad) * W + (kx - pad)
            hs = pltpu.roll(h, shift=(-d) % P, axis=1)
            acc = acc + hs * mask[t:t + 1, :] * dw[:, t:t + 1]
    acc = jnp.where(acc >= 0, acc, 0.2 * acc)        # LeakyReLU(0.2)

    # ---- 1x1 project (block-diag) + residual: seed with x, BH FMAs ----------
    w2 = w2_ref[...]                                 # (B*nf, B*hidden)
    bh = w2.shape[1]
    y = x
    for r in range(bh):
        y = y + acc[r:r + 1, :] * w2[:, r:r + 1]
    out_ref[...] = y.astype(out_ref.dtype)


def dpcb_bottleneck(x_nchw, w1, dw, dwb, w2, ksize):
    """x_nchw: (B, nf, H, W); w1: (hidden, nf); dw: (hidden, k, k);
    dwb: (hidden,); w2: (nf, hidden).  Returns (B, nf, H, W)."""
    B, nf, H, W = x_nchw.shape
    hidden = w1.shape[0]
    P = H * W
    pad = ksize // 2
    BNF, BH, KK = B * nf, B * hidden, ksize * ksize
    dt = x_nchw.dtype
    assert P % 128 == 0, "toy-size path assumes H*W is lane-dense; row-band tile otherwise"
    # TODO(synk): general H,W / large H*W needs row-band tiling with a halo.

    # Lane-dense planar slab with batch folded into the sublane axis.
    x2 = x_nchw.reshape(BNF, P)

    # Host-side, weights-only preprocessing (tiny, O(B*C*k^2)):
    eye = jnp.eye(B, dtype=dt)
    w1_big = jnp.kron(eye, w1)                                   # (BH, BNF) block-diag
    w2_big = jnp.kron(eye, w2)                                   # (BNF, BH) block-diag
    dw_taps = jnp.tile(dw.reshape(hidden, KK), (B, 1))           # (BH, KK)
    dwb2 = jnp.tile(dwb, B).reshape(BH, 1)                       # (BH, 1)

    # Channel/batch-independent zero-padding validity mask, (k*k, P).
    pidx = jnp.arange(P)
    hh, ww = pidx // W, pidx % W
    rows = []
    for ky in range(ksize):
        for kx in range(ksize):
            dy, dx = ky - pad, kx - pad
            rows.append(((hh + dy >= 0) & (hh + dy < H) &
                         (ww + dx >= 0) & (ww + dx < W)).astype(dt))
    mask = jnp.stack(rows, axis=0)                               # (KK, P)

    kern = functools.partial(_dpcb_kernel, ksize=ksize, W=W, P=P)
    out_flat = pl.pallas_call(
        kern,
        out_shape=jax.ShapeDtypeStruct((BNF, P), dt),
        grid_spec=pltpu.PrefetchScalarGridSpec(
            num_scalar_prefetch=0,
            grid=(1,),  # single fused step: no per-batch grid-loop overhead
            in_specs=[
                pl.BlockSpec((BNF, P), lambda i: (0, 0)),        # x (batch-folded)
                pl.BlockSpec((BH, BNF), lambda i: (0, 0)),       # w1 block-diag
                pl.BlockSpec((BH, KK), lambda i: (0, 0)),        # depthwise taps
                pl.BlockSpec((KK, P), lambda i: (0, 0)),         # zero-pad mask
                pl.BlockSpec((BH, 1), lambda i: (0, 0)),         # depthwise bias
                pl.BlockSpec((BNF, BH), lambda i: (0, 0)),       # w2 block-diag
            ],
            out_specs=pl.BlockSpec((BNF, P), lambda i: (0, 0)),
        ),
        compiler_params=pltpu.CompilerParams(dimension_semantics=("arbitrary",)),
    )(x2, w1_big, dw_taps, mask, dwb2, w2_big)
    return out_flat.reshape(B, nf, H, W)


def reference(x_nchw, w1, dw, dwb, w2, ksize):
    """Pure-JAX reference matching the PyTorch module semantics (NCHW)."""
    hidden = w1.shape[0]
    hp = lax.Precision.HIGHEST
    h = jnp.einsum("bchw,dc->bdhw", x_nchw, w1, precision=hp)
    h = jnp.where(h >= 0, h, 0.5 * h)
    h2 = lax.conv_general_dilated(
        h, dw.reshape(hidden, 1, ksize, ksize),
        window_strides=(1, 1), padding="SAME",
        dimension_numbers=("NCHW", "OIHW", "NCHW"),
        feature_group_count=hidden, precision=hp)
    h2 = h2 + dwb.reshape(1, hidden, 1, 1)
    h2 = jnp.where(h2 >= 0, h2, 0.2 * h2)
    y = jnp.einsum("bchw,dc->bdhw", h2, w2, precision=hp)
    return x_nchw + y


if __name__ == "__main__":
    # Small shapes consistent with the module: nf=4, ksize=3, expand_ratio=2.
    B, nf, H, W = 2, 4, 16, 16
    ksize, expand_ratio = 3, 2
    hidden = round(nf * expand_ratio)               # = 8

    key = jax.random.PRNGKey(0)
    k_x, k_w1, k_dw, k_db, k_w2 = jax.random.split(key, 5)

    # Deterministic synthetic parameters in PyTorch's [out, in] conv layout:
    #   conv1 (hidden, nf, 1, 1) -> (hidden, nf); depthwise (hidden, 1, k, k)
    #   -> (hidden, k, k); bias (hidden,); conv3 (nf, hidden, 1, 1) -> (nf, hidden).
    x = jax.random.normal(k_x, (B, nf, H, W), jnp.float32)
    w1 = 0.1 * jax.random.normal(k_w1, (hidden, nf), jnp.float32)
    dw = 0.1 * jax.random.normal(k_dw, (hidden, ksize, ksize), jnp.float32)
    dwb = 0.1 * jax.random.normal(k_db, (hidden,), jnp.float32)
    w2 = 0.1 * jax.random.normal(k_w2, (nf, hidden), jnp.float32)

    out = jax.block_until_ready(dpcb_bottleneck(x, w1, dw, dwb, w2, ksize))
    ref = reference(x, w1, dw, dwb, w2, ksize)
    assert out.shape == (B, nf, H, W) and out.dtype == jnp.float32
    err = float(jnp.max(jnp.abs(out - ref)))
    assert jnp.allclose(out, ref, atol=1e-4, rtol=1e-4), err

    jax.block_until_ready(out)
    print("KERNEL_OK")
</pallas_src>

<mosaic_0001>
module attributes {stable_mosaic.version = 11 : i64} {
  func.func @_dpcb_kernel(%arg0: i32, %arg1: memref<8x256xf32, #tpu.memory_space<vmem>>, %arg2: memref<16x8xf32, #tpu.memory_space<vmem>>, %arg3: memref<16x9xf32, #tpu.memory_space<vmem>>, %arg4: memref<9x256xf32, #tpu.memory_space<vmem>>, %arg5: memref<16x1xf32, #tpu.memory_space<vmem>>, %arg6: memref<8x16xf32, #tpu.memory_space<vmem>>, %arg7: memref<8x256xf32, #tpu.memory_space<vmem>>) attributes {dimension_semantics = [#tpu.dimension_semantics<arbitrary>], iteration_bounds = array<i64: 1>, scalar_prefetch = 0 : i64, scratch_operands = 0 : i64, tpu.core_type = #tpu.core_type<tc>, window_params = [{pipeline_mode = #tpu.pipeline_mode<synchronous>, transform_indices = @transform_0, window_bounds = array<i64: 8, 256>}, {pipeline_mode = #tpu.pipeline_mode<synchronous>, transform_indices = @transform_1, window_bounds = array<i64: 16, 8>}, {pipeline_mode = #tpu.pipeline_mode<synchronous>, transform_indices = @transform_2, window_bounds = array<i64: 16, 9>}, {pipeline_mode = #tpu.pipeline_mode<synchronous>, transform_indices = @transform_3, window_bounds = array<i64: 9, 256>}, {pipeline_mode = #tpu.pipeline_mode<synchronous>, transform_indices = @transform_4, window_bounds = array<i64: 16, 1>}, {pipeline_mode = #tpu.pipeline_mode<synchronous>, transform_indices = @transform_5, window_bounds = array<i64: 8, 16>}, {pipeline_mode = #tpu.pipeline_mode<synchronous>, transform_indices = @transform_6, window_bounds = array<i64: 8, 256>}]} {
    %c0 = arith.constant 0 : index
    %c0_0 = arith.constant 0 : index
    %0 = vector.load %arg1[%c0, %c0_0] : memref<8x256xf32, #tpu.memory_space<vmem>>, vector<8x256xf32>
    %c0_1 = arith.constant 0 : index
    %c0_2 = arith.constant 0 : index
    %1 = vector.load %arg2[%c0_1, %c0_2] : memref<16x8xf32, #tpu.memory_space<vmem>>, vector<16x8xf32>
    %2 = vector.extract_strided_slice %0 {offsets = [0, 0], sizes = [1, 256], strides = [1, 1]} : vector<8x256xf32> to vector<1x256xf32>
    %3 = vector.extract_strided_slice %1 {offsets = [0, 0], sizes = [16, 1], strides = [1, 1]} : vector<16x8xf32> to vector<16x1xf32>
    %4 = vector.broadcast %2 : vector<1x256xf32> to vector<16x256xf32>
    %5 = vector.broadcast %3 : vector<16x1xf32> to vector<16x256xf32>
    %6 = arith.mulf %4, %5 : vector<16x256xf32>
    %7 = vector.extract_strided_slice %0 {offsets = [1, 0], sizes = [1, 256], strides = [1, 1]} : vector<8x256xf32> to vector<1x256xf32>
    %8 = vector.extract_strided_slice %1 {offsets = [0, 1], sizes = [16, 1], strides = [1, 1]} : vector<16x8xf32> to vector<16x1xf32>
    %9 = vector.broadcast %7 : vector<1x256xf32> to vector<16x256xf32>
    %10 = vector.broadcast %8 : vector<16x1xf32> to vector<16x256xf32>
    %11 = arith.mulf %9, %10 : vector<16x256xf32>
    %12 = arith.addf %6, %11 : vector<16x256xf32>
    %13 = vector.extract_strided_slice %0 {offsets = [2, 0], sizes = [1, 256], strides = [1, 1]} : vector<8x256xf32> to vector<1x256xf32>
    %14 = vector.extract_strided_slice %1 {offsets = [0, 2], sizes = [16, 1], strides = [1, 1]} : vector<16x8xf32> to vector<16x1xf32>
    %15 = vector.broadcast %13 : vector<1x256xf32> to vector<16x256xf32>
    %16 = vector.broadcast %14 : vector<16x1xf32> to vector<16x256xf32>
    %17 = arith.mulf %15, %16 : vector<16x256xf32>
    %18 = arith.addf %12, %17 : vector<16x256xf32>
    %19 = vector.extract_strided_slice %0 {offsets = [3, 0], sizes = [1, 256], strides = [1, 1]} : vector<8x256xf32> to vector<1x256xf32>
    %20 = vector.extract_strided_slice %1 {offsets = [0, 3], sizes = [16, 1], strides = [1, 1]} : vector<16x8xf32> to vector<16x1xf32>
    %21 = vector.broadcast %19 : vector<1x256xf32> to vector<16x256xf32>
    %22 = vector.broadcast %20 : vector<16x1xf32> to vector<16x256xf32>
    %23 = arith.mulf %21, %22 : vector<16x256xf32>
    %24 = arith.addf %18, %23 : vector<16x256xf32>
    %25 = vector.extract_strided_slice %0 {offsets = [4, 0], sizes = [1, 256], strides = [1, 1]} : vector<8x256xf32> to vector<1x256xf32>
    %26 = vector.extract_strided_slice %1 {offsets = [0, 4], sizes = [16, 1], strides = [1, 1]} : vector<16x8xf32> to vector<16x1xf32>
    %27 = vector.broadcast %25 : vector<1x256xf32> to vector<16x256xf32>
    %28 = vector.broadcast %26 : vector<16x1xf32> to vector<16x256xf32>
    %29 = arith.mulf %27, %28 : vector<16x256xf32>
    %30 = arith.addf %24, %29 : vector<16x256xf32>
    %31 = vector.extract_strided_slice %0 {offsets = [5, 0], sizes = [1, 256], strides = [1, 1]} : vector<8x256xf32> to vector<1x256xf32>
    %32 = vector.extract_strided_slice %1 {offsets = [0, 5], sizes = [16, 1], strides = [1, 1]} : vector<16x8xf32> to vector<16x1xf32>
    %33 = vector.broadcast %31 : vector<1x256xf32> to vector<16x256xf32>
    %34 = vector.broadcast %32 : vector<16x1xf32> to vector<16x256xf32>
    %35 = arith.mulf %33, %34 : vector<16x256xf32>
    %36 = arith.addf %30, %35 : vector<16x256xf32>
    %37 = vector.extract_strided_slice %0 {offsets = [6, 0], sizes = [1, 256], strides = [1, 1]} : vector<8x256xf32> to vector<1x256xf32>
    %38 = vector.extract_strided_slice %1 {offsets = [0, 6], sizes = [16, 1], strides = [1, 1]} : vector<16x8xf32> to vector<16x1xf32>
    %39 = vector.broadcast %37 : vector<1x256xf32> to vector<16x256xf32>
    %40 = vector.broadcast %38 : vector<16x1xf32> to vector<16x256xf32>
    %41 = arith.mulf %39, %40 : vector<16x256xf32>
    %42 = arith.addf %36, %41 : vector<16x256xf32>
    %43 = vector.extract_strided_slice %0 {offsets = [7, 0], sizes = [1, 256], strides = [1, 1]} : vector<8x256xf32> to vector<1x256xf32>
    %44 = vector.extract_strided_slice %1 {offsets = [0, 7], sizes = [16, 1], strides = [1, 1]} : vector<16x8xf32> to vector<16x1xf32>
    %45 = vector.broadcast %43 : vector<1x256xf32> to vector<16x256xf32>
    %46 = vector.broadcast %44 : vector<16x1xf32> to vector<16x256xf32>
    %47 = arith.mulf %45, %46 : vector<16x256xf32>
    %48 = arith.addf %42, %47 : vector<16x256xf32>
    %cst = arith.constant 0.000000e+00 : f32
    %49 = vector.broadcast %cst : f32 to vector<16x256xf32>
    %50 = arith.cmpf oge, %48, %49 : vector<16x256xf32>
    %cst_3 = arith.constant 5.000000e-01 : f32
    %51 = vector.broadcast %cst_3 : f32 to vector<16x256xf32>
    %52 = arith.mulf %51, %48 : vector<16x256xf32>
    %53 = arith.select %50, %48, %52 : vector<16x256xi1>, vector<16x256xf32>
    %c0_4 = arith.constant 0 : index
    %c0_5 = arith.constant 0 : index
    %54 = vector.load %arg3[%c0_4, %c0_5] : memref<16x9xf32, #tpu.memory_space<vmem>>, vector<16x9xf32>
    %c0_6 = arith.constant 0 : index
    %c0_7 = arith.constant 0 : index
    %55 = vector.load %arg4[%c0_6, %c0_7] : memref<9x256xf32, #tpu.memory_space<vmem>>, vector<9x256xf32>
    %56 = vector.extract_strided_slice %54 {offsets = [0, 4], sizes = [16, 1], strides = [1, 1]} : vector<16x9xf32> to vector<16x1xf32>
    %57 = vector.broadcast %56 : vector<16x1xf32> to vector<16x256xf32>
    %58 = arith.mulf %53, %57 : vector<16x256xf32>
    %c0_8 = arith.constant 0 : index
    %c0_9 = arith.constant 0 : index
    %59 = vector.load %arg5[%c0_8, %c0_9] : memref<16x1xf32, #tpu.memory_space<vmem>>, vector<16x1xf32>
    %60 = vector.broadcast %59 : vector<16x1xf32> to vector<16x256xf32>
    %61 = arith.addf %58, %60 : vector<16x256xf32>
    %c17_i32 = arith.constant 17 : i32
    %62 = tpu.dynamic_rotate %53 by %c17_i32 dim 1 : vector<16x256xf32>, i32 -> vector<16x256xf32>
    %63 = vector.extract_strided_slice %55 {offsets = [0, 0], sizes = [1, 256], strides = [1, 1]} : vector<9x256xf32> to vector<1x256xf32>
    %64 = vector.broadcast %63 : vector<1x256xf32> to vector<16x256xf32>
    %65 = arith.mulf %62, %64 : vector<16x256xf32>
    %66 = vector.extract_strided_slice %54 {offsets = [0, 0], sizes = [16, 1], strides = [1, 1]} : vector<16x9xf32> to vector<16x1xf32>
    %67 = vector.broadcast %66 : vector<16x1xf32> to vector<16x256xf32>
    %68 = arith.mulf %65, %67 : vector<16x256xf32>
    %69 = arith.addf %61, %68 : vector<16x256xf32>
    %c16_i32 = arith.constant 16 : i32
    %70 = tpu.dynamic_rotate %53 by %c16_i32 dim 1 : vector<16x256xf32>, i32 -> vector<16x256xf32>
    %71 = vector.extract_strided_slice %55 {offsets = [1, 0], sizes = [1, 256], strides = [1, 1]} : vector<9x256xf32> to vector<1x256xf32>
    %72 = vector.broadcast %71 : vector<1x256xf32> to vector<16x256xf32>
    %73 = arith.mulf %70, %72 : vector<16x256xf32>
    %74 = vector.extract_strided_slice %54 {offsets = [0, 1], sizes = [16, 1], strides = [1, 1]} : vector<16x9xf32> to vector<16x1xf32>
    %75 = vector.broadcast %74 : vector<16x1xf32> to vector<16x256xf32>
    %76 = arith.mulf %73, %75 : vector<16x256xf32>
    %77 = arith.addf %69, %76 : vector<16x256xf32>
    %c15_i32 = arith.constant 15 : i32
    %78 = tpu.dynamic_rotate %53 by %c15_i32 dim 1 : vector<16x256xf32>, i32 -> vector<16x256xf32>
    %79 = vector.extract_strided_slice %55 {offsets = [2, 0], sizes = [1, 256], strides = [1, 1]} : vector<9x256xf32> to vector<1x256xf32>
    %80 = vector.broadcast %79 : vector<1x256xf32> to vector<16x256xf32>
    %81 = arith.mulf %78, %80 : vector<16x256xf32>
    %82 = vector.extract_strided_slice %54 {offsets = [0, 2], sizes = [16, 1], strides = [1, 1]} : vector<16x9xf32> to vector<16x1xf32>
    %83 = vector.broadcast %82 : vector<16x1xf32> to vector<16x256xf32>
    %84 = arith.mulf %81, %83 : vector<16x256xf32>
    %85 = arith.addf %77, %84 : vector<16x256xf32>
    %c1_i32 = arith.constant 1 : i32
    %86 = tpu.dynamic_rotate %53 by %c1_i32 dim 1 : vector<16x256xf32>, i32 -> vector<16x256xf32>
    %87 = vector.extract_strided_slice %55 {offsets = [3, 0], sizes = [1, 256], strides = [1, 1]} : vector<9x256xf32> to vector<1x256xf32>
    %88 = vector.broadcast %87 : vector<1x256xf32> to vector<16x256xf32>
    %89 = arith.mulf %86, %88 : vector<16x256xf32>
    %90 = vector.extract_strided_slice %54 {offsets = [0, 3], sizes = [16, 1], strides = [1, 1]} : vector<16x9xf32> to vector<16x1xf32>
    %91 = vector.broadcast %90 : vector<16x1xf32> to vector<16x256xf32>
    %92 = arith.mulf %89, %91 : vector<16x256xf32>
    %93 = arith.addf %85, %92 : vector<16x256xf32>
    %c255_i32 = arith.constant 255 : i32
    %94 = tpu.dynamic_rotate %53 by %c255_i32 dim 1 : vector<16x256xf32>, i32 -> vector<16x256xf32>
    %95 = vector.extract_strided_slice %55 {offsets = [5, 0], sizes = [1, 256], strides = [1, 1]} : vector<9x256xf32> to vector<1x256xf32>
    %96 = vector.broadcast %95 : vector<1x256xf32> to vector<16x256xf32>
    %97 = arith.mulf %94, %96 : vector<16x256xf32>
    %98 = vector.extract_strided_slice %54 {offsets = [0, 5], sizes = [16, 1], strides = [1, 1]} : vector<16x9xf32> to vector<16x1xf32>
    %99 = vector.broadcast %98 : vector<16x1xf32> to vector<16x256xf32>
    %100 = arith.mulf %97, %99 : vector<16x256xf32>
    %101 = arith.addf %93, %100 : vector<16x256xf32>
    %c241_i32 = arith.constant 241 : i32
    %102 = tpu.dynamic_rotate %53 by %c241_i32 dim 1 : vector<16x256xf32>, i32 -> vector<16x256xf32>
    %103 = vector.extract_strided_slice %55 {offsets = [6, 0], sizes = [1, 256], strides = [1, 1]} : vector<9x256xf32> to vector<1x256xf32>
    %104 = vector.broadcast %103 : vector<1x256xf32> to vector<16x256xf32>
    %105 = arith.mulf %102, %104 : vector<16x256xf32>
    %106 = vector.extract_strided_slice %54 {offsets = [0, 6], sizes = [16, 1], strides = [1, 1]} : vector<16x9xf32> to vector<16x1xf32>
    %107 = vector.broadcast %106 : vector<16x1xf32> to vector<16x256xf32>
    %108 = arith.mulf %105, %107 : vector<16x256xf32>
    %109 = arith.addf %101, %108 : vector<16x256xf32>
    %c240_i32 = arith.constant 240 : i32
    %110 = tpu.dynamic_rotate %53 by %c240_i32 dim 1 : vector<16x256xf32>, i32 -> vector<16x256xf32>
    %111 = vector.extract_strided_slice %55 {offsets = [7, 0], sizes = [1, 256], strides = [1, 1]} : vector<9x256xf32> to vector<1x256xf32>
    %112 = vector.broadcast %111 : vector<1x256xf32> to vector<16x256xf32>
    %113 = arith.mulf %110, %112 : vector<16x256xf32>
    %114 = vector.extract_strided_slice %54 {offsets = [0, 7], sizes = [16, 1], strides = [1, 1]} : vector<16x9xf32> to vector<16x1xf32>
    %115 = vector.broadcast %114 : vector<16x1xf32> to vector<16x256xf32>
    %116 = arith.mulf %113, %115 : vector<16x256xf32>
    %117 = arith.addf %109, %116 : vector<16x256xf32>
    %c239_i32 = arith.constant 239 : i32
    %118 = tpu.dynamic_rotate %53 by %c239_i32 dim 1 : vector<16x256xf32>, i32 -> vector<16x256xf32>
    %119 = vector.extract_strided_slice %55 {offsets = [8, 0], sizes = [1, 256], strides = [1, 1]} : vector<9x256xf32> to vector<1x256xf32>
    %120 = vector.broadcast %119 : vector<1x256xf32> to vector<16x256xf32>
    %121 = arith.mulf %118, %120 : vector<16x256xf32>
    %122 = vector.extract_strided_slice %54 {offsets = [0, 8], sizes = [16, 1], strides = [1, 1]} : vector<16x9xf32> to vector<16x1xf32>
    %123 = vector.broadcast %122 : vector<16x1xf32> to vector<16x256xf32>
    %124 = arith.mulf %121, %123 : vector<16x256xf32>
    %125 = arith.addf %117, %124 : vector<16x256xf32>
    %cst_10 = arith.constant 0.000000e+00 : f32
    %126 = vector.broadcast %cst_10 : f32 to vector<16x256xf32>
    %127 = arith.cmpf oge, %125, %126 : vector<16x256xf32>
    %cst_11 = arith.constant 2.000000e-01 : f32
    %128 = vector.broadcast %cst_11 : f32 to vector<16x256xf32>
    %129 = arith.mulf %128, %125 : vector<16x256xf32>
    %130 = arith.select %127, %125, %129 : vector<16x256xi1>, vector<16x256xf32>
    %c0_12 = arith.constant 0 : index
    %c0_13 = arith.constant 0 : index
    %131 = vector.load %arg6[%c0_12, %c0_13] : memref<8x16xf32, #tpu.memory_space<vmem>>, vector<8x16xf32>
    %132 = vector.extract_strided_slice %130 {offsets = [0, 0], sizes = [1, 256], strides = [1, 1]} : vector<16x256xf32> to vector<1x256xf32>
    %133 = vector.extract_strided_slice %131 {offsets = [0, 0], sizes = [8, 1], strides = [1, 1]} : vector<8x16xf32> to vector<8x1xf32>
    %134 = vector.broadcast %132 : vector<1x256xf32> to vector<8x256xf32>
    %135 = vector.broadcast %133 : vector<8x1xf32> to vector<8x256xf32>
    %136 = arith.mulf %134, %135 : vector<8x256xf32>
    %137 = arith.addf %0, %136 : vector<8x256xf32>
    %138 = vector.extract_strided_slice %130 {offsets = [1, 0], sizes = [1, 256], strides = [1, 1]} : vector<16x256xf32> to vector<1x256xf32>
    %139 = vector.extract_strided_slice %131 {offsets = [0, 1], sizes = [8, 1], strides = [1, 1]} : vector<8x16xf32> to vector<8x1xf32>
    %140 = vector.broadcast %138 : vector<1x256xf32> to vector<8x256xf32>
    %141 = vector.broadcast %139 : vector<8x1xf32> to vector<8x256xf32>
    %142 = arith.mulf %140, %141 : vector<8x256xf32>
    %143 = arith.addf %137, %142 : vector<8x256xf32>
    %144 = vector.extract_strided_slice %130 {offsets = [2, 0], sizes = [1, 256], strides = [1, 1]} : vector<16x256xf32> to vector<1x256xf32>
    %145 = vector.extract_strided_slice %131 {offsets = [0, 2], sizes = [8, 1], strides = [1, 1]} : vector<8x16xf32> to vector<8x1xf32>
    %146 = vector.broadcast %144 : vector<1x256xf32> to vector<8x256xf32>
    %147 = vector.broadcast %145 : vector<8x1xf32> to vector<8x256xf32>
    %148 = arith.mulf %146, %147 : vector<8x256xf32>
    %149 = arith.addf %143, %148 : vector<8x256xf32>
    %150 = vector.extract_strided_slice %130 {offsets = [3, 0], sizes = [1, 256], strides = [1, 1]} : vector<16x256xf32> to vector<1x256xf32>
    %151 = vector.extract_strided_slice %131 {offsets = [0, 3], sizes = [8, 1], strides = [1, 1]} : vector<8x16xf32> to vector<8x1xf32>
    %152 = vector.broadcast %150 : vector<1x256xf32> to vector<8x256xf32>
    %153 = vector.broadcast %151 : vector<8x1xf32> to vector<8x256xf32>
    %154 = arith.mulf %152, %153 : vector<8x256xf32>
    %155 = arith.addf %149, %154 : vector<8x256xf32>
    %156 = vector.extract_strided_slice %130 {offsets = [4, 0], sizes = [1, 256], strides = [1, 1]} : vector<16x256xf32> to vector<1x256xf32>
    %157 = vector.extract_strided_slice %131 {offsets = [0, 4], sizes = [8, 1], strides = [1, 1]} : vector<8x16xf32> to vector<8x1xf32>
    %158 = vector.broadcast %156 : vector<1x256xf32> to vector<8x256xf32>
    %159 = vector.broadcast %157 : vector<8x1xf32> to vector<8x256xf32>
    %160 = arith.mulf %158, %159 : vector<8x256xf32>
    %161 = arith.addf %155, %160 : vector<8x256xf32>
    %162 = vector.extract_strided_slice %130 {offsets = [5, 0], sizes = [1, 256], strides = [1, 1]} : vector<16x256xf32> to vector<1x256xf32>
    %163 = vector.extract_strided_slice %131 {offsets = [0, 5], sizes = [8, 1], strides = [1, 1]} : vector<8x16xf32> to vector<8x1xf32>
    %164 = vector.broadcast %162 : vector<1x256xf32> to vector<8x256xf32>
    %165 = vector.broadcast %163 : vector<8x1xf32> to vector<8x256xf32>
    %166 = arith.mulf %164, %165 : vector<8x256xf32>
    %167 = arith.addf %161, %166 : vector<8x256xf32>
    %168 = vector.extract_strided_slice %130 {offsets = [6, 0], sizes = [1, 256], strides = [1, 1]} : vector<16x256xf32> to vector<1x256xf32>
    %169 = vector.extract_strided_slice %131 {offsets = [0, 6], sizes = [8, 1], strides = [1, 1]} : vector<8x16xf32> to vector<8x1xf32>
    %170 = vector.broadcast %168 : vector<1x256xf32> to vector<8x256xf32>
    %171 = vector.broadcast %169 : vector<8x1xf32> to vector<8x256xf32>
    %172 = arith.mulf %170, %171 : vector<8x256xf32>
    %173 = arith.addf %167, %172 : vector<8x256xf32>
    %174 = vector.extract_strided_slice %130 {offsets = [7, 0], sizes = [1, 256], strides = [1, 1]} : vector<16x256xf32> to vector<1x256xf32>
    %175 = vector.extract_strided_slice %131 {offsets = [0, 7], sizes = [8, 1], strides = [1, 1]} : vector<8x16xf32> to vector<8x1xf32>
    %176 = vector.broadcast %174 : vector<1x256xf32> to vector<8x256xf32>
    %177 = vector.broadcast %175 : vector<8x1xf32> to vector<8x256xf32>
    %178 = arith.mulf %176, %177 : vector<8x256xf32>
    %179 = arith.addf %173, %178 : vector<8x256xf32>
    %180 = vector.extract_strided_slice %130 {offsets = [8, 0], sizes = [1, 256], strides = [1, 1]} : vector<16x256xf32> to vector<1x256xf32>
    %181 = vector.extract_strided_slice %131 {offsets = [0, 8], sizes = [8, 1], strides = [1, 1]} : vector<8x16xf32> to vector<8x1xf32>
    %182 = vector.broadcast %180 : vector<1x256xf32> to vector<8x256xf32>
    %183 = vector.broadcast %181 : vector<8x1xf32> to vector<8x256xf32>
    %184 = arith.mulf %182, %183 : vector<8x256xf32>
    %185 = arith.addf %179, %184 : vector<8x256xf32>
    %186 = vector.extract_strided_slice %130 {offsets = [9, 0], sizes = [1, 256], strides = [1, 1]} : vector<16x256xf32> to vector<1x256xf32>
    %187 = vector.extract_strided_slice %131 {offsets = [0, 9], sizes = [8, 1], strides = [1, 1]} : vector<8x16xf32> to vector<8x1xf32>
    %188 = vector.broadcast %186 : vector<1x256xf32> to vector<8x256xf32>
    %189 = vector.broadcast %187 : vector<8x1xf32> to vector<8x256xf32>
    %190 = arith.mulf %188, %189 : vector<8x256xf32>
    %191 = arith.addf %185, %190 : vector<8x256xf32>
    %192 = vector.extract_strided_slice %130 {offsets = [10, 0], sizes = [1, 256], strides = [1, 1]} : vector<16x256xf32> to vector<1x256xf32>
    %193 = vector.extract_strided_slice %131 {offsets = [0, 10], sizes = [8, 1], strides = [1, 1]} : vector<8x16xf32> to vector<8x1xf32>
    %194 = vector.broadcast %192 : vector<1x256xf32> to vector<8x256xf32>
    %195 = vector.broadcast %193 : vector<8x1xf32> to vector<8x256xf32>
    %196 = arith.mulf %194, %195 : vector<8x256xf32>
    %197 = arith.addf %191, %196 : vector<8x256xf32>
    %198 = vector.extract_strided_slice %130 {offsets = [11, 0], sizes = [1, 256], strides = [1, 1]} : vector<16x256xf32> to vector<1x256xf32>
    %199 = vector.extract_strided_slice %131 {offsets = [0, 11], sizes = [8, 1], strides = [1, 1]} : vector<8x16xf32> to vector<8x1xf32>
    %200 = vector.broadcast %198 : vector<1x256xf32> to vector<8x256xf32>
    %201 = vector.broadcast %199 : vector<8x1xf32> to vector<8x256xf32>
    %202 = arith.mulf %200, %201 : vector<8x256xf32>
    %203 = arith.addf %197, %202 : vector<8x256xf32>
    %204 = vector.extract_strided_slice %130 {offsets = [12, 0], sizes = [1, 256], strides = [1, 1]} : vector<16x256xf32> to vector<1x256xf32>
    %205 = vector.extract_strided_slice %131 {offsets = [0, 12], sizes = [8, 1], strides = [1, 1]} : vector<8x16xf32> to vector<8x1xf32>
    %206 = vector.broadcast %204 : vector<1x256xf32> to vector<8x256xf32>
    %207 = vector.broadcast %205 : vector<8x1xf32> to vector<8x256xf32>
    %208 = arith.mulf %206, %207 : vector<8x256xf32>
    %209 = arith.addf %203, %208 : vector<8x256xf32>
    %210 = vector.extract_strided_slice %130 {offsets = [13, 0], sizes = [1, 256], strides = [1, 1]} : vector<16x256xf32> to vector<1x256xf32>
    %211 = vector.extract_strided_slice %131 {offsets = [0, 13], sizes = [8, 1], strides = [1, 1]} : vector<8x16xf32> to vector<8x1xf32>
    %212 = vector.broadcast %210 : vector<1x256xf32> to vector<8x256xf32>
    %213 = vector.broadcast %211 : vector<8x1xf32> to vector<8x256xf32>
    %214 = arith.mulf %212, %213 : vector<8x256xf32>
    %215 = arith.addf %209, %214 : vector<8x256xf32>
    %216 = vector.extract_strided_slice %130 {offsets = [14, 0], sizes = [1, 256], strides = [1, 1]} : vector<16x256xf32> to vector<1x256xf32>
    %217 = vector.extract_strided_slice %131 {offsets = [0, 14], sizes = [8, 1], strides = [1, 1]} : vector<8x16xf32> to vector<8x1xf32>
    %218 = vector.broadcast %216 : vector<1x256xf32> to vector<8x256xf32>
    %219 = vector.broadcast %217 : vector<8x1xf32> to vector<8x256xf32>
    %220 = arith.mulf %218, %219 : vector<8x256xf32>
    %221 = arith.addf %215, %220 : vector<8x256xf32>
    %222 = vector.extract_strided_slice %130 {offsets = [15, 0], sizes = [1, 256], strides = [1, 1]} : vector<16x256xf32> to vector<1x256xf32>
    %223 = vector.extract_strided_slice %131 {offsets = [0, 15], sizes = [8, 1], strides = [1, 1]} : vector<8x16xf32> to vector<8x1xf32>
    %224 = vector.broadcast %222 : vector<1x256xf32> to vector<8x256xf32>
    %225 = vector.broadcast %223 : vector<8x1xf32> to vector<8x256xf32>
    %226 = arith.mulf %224, %225 : vector<8x256xf32>
    %227 = arith.addf %221, %226 : vector<8x256xf32>
    %c0_14 = arith.constant 0 : index
    %c0_15 = arith.constant 0 : index
    %228 = vector.load %arg7[%c0_14, %c0_15] : memref<8x256xf32, #tpu.memory_space<vmem>>, vector<8x256xf32>
    tpu.vector_store %arg7[%c0_14, %c0_15], %227 {strides = array<i32>} : memref<8x256xf32, #tpu.memory_space<vmem>>, vector<8x256xf32>,
    return
  }
  func.func @transform_0(%arg0: i32) -> (i32, i32) {
    %c0_i32 = arith.constant 0 : i32
    %c0_i32_0 = arith.constant 0 : i32
    %c0_i32_1 = arith.constant 0 : i32
    return %c0_i32, %c0_i32_0 : i32, i32
  }
  func.func @transform_1(%arg0: i32) -> (i32, i32) {
    %c0_i32 = arith.constant 0 : i32
    %c0_i32_0 = arith.constant 0 : i32
    %c0_i32_1 = arith.constant 0 : i32
    return %c0_i32, %c0_i32_0 : i32, i32
  }
  func.func @transform_2(%arg0: i32) -> (i32, i32) {
    %c0_i32 = arith.constant 0 : i32
    %c0_i32_0 = arith.constant 0 : i32
    %c0_i32_1 = arith.constant 0 : i32
    return %c0_i32, %c0_i32_0 : i32, i32
  }
  func.func @transform_3(%arg0: i32) -> (i32, i32) {
    %c0_i32 = arith.constant 0 : i32
    %c0_i32_0 = arith.constant 0 : i32
    %c0_i32_1 = arith.constant 0 : i32
    return %c0_i32, %c0_i32_0 : i32, i32
  }
  func.func @transform_4(%arg0: i32) -> (i32, i32) {
    %c0_i32 = arith.constant 0 : i32
    %c0_i32_0 = arith.constant 0 : i32
    %c0_i32_1 = arith.constant 0 : i32
    return %c0_i32, %c0_i32_0 : i32, i32
  }
  func.func @transform_5(%arg0: i32) -> (i32, i32) {
    %c0_i32 = arith.constant 0 : i32
    %c0_i32_0 = arith.constant 0 : i32
    %c0_i32_1 = arith.constant 0 : i32
    return %c0_i32, %c0_i32_0 : i32, i32
  }
  func.func @transform_6(%arg0: i32) -> (i32, i32) {
    %c0_i32 = arith.constant 0 : i32
    %c0_i32_0 = arith.constant 0 : i32
    %c0_i32_1 = arith.constant 0 : i32
    return %c0_i32, %c0_i32_0 : i32, i32
  }
}

</mosaic_0001>

<llo_original>
// kernel: tpu_custom_call.1
$region0: #{tpu_custom_call.1}
  #allocation0 [shape = 'u32[]', space=smem, size = 0x4, offset = 0x4, fixed_abs, tag = 'smem constant byte address 0x4 - core index']
  #allocation1 [shape = 'u32[144,128]{1,0:T(1,128)}', space=vmem, size = 0x12000, scoped, tag = 'internal scratch']
  %s0 = inlined_call_operand.hbm [shape: f32[8,256], index: 0, kind: input, shape index: {}]
  %s1 = inlined_call_operand.vmem [shape: f32[16,8], index: 1, kind: input, shape index: {}]
  %s2 = inlined_call_operand.hbm [shape: f32[16,9], index: 2, kind: input, shape index: {}]
  %s3 = inlined_call_operand.vmem [shape: f32[9,256], index: 3, kind: input, shape index: {}]
  %s4 = inlined_call_operand.vmem [shape: f32[16,1], index: 4, kind: input, shape index: {}]
  %s5 = inlined_call_operand.vmem [shape: f32[8,16], index: 5, kind: input, shape index: {}]
  %s6 = inlined_call_operand.hbm [shape: f32[8,256], index: 6, kind: output, shape index: {}]
  %s7 = sld [smem:[#allocation0]]
  $region42: #{tpu_custom_call.1} parent=0
    _
  %s9 = ssub.s32 1, %s7
  %s10 = scalar_select 0, %s9, %s7
  $region1: #{tpu_custom_call.1} parent=0
    #allocation2 [shape = 'u8[8192]{0}', space=vmem, size = 0x2000, scoped, tag = 'input window, operand 0, single buffered']
    #allocation3 [shape = 's32[1]{0}', space=sflag, size = 0x4, scoped, tag = 'scoped memory for tpu_custom_call.1']
    #allocation4 [shape = 's32[1]{0}', space=sflag, size = 0x4, scoped, tag = 'scoped memory for tpu_custom_call.1']
    #allocation5 [shape = 'u8[8192]{0}', space=vmem, size = 0x2000, scoped, tag = 'input window, operand 2, single buffered']
    #allocation6 [shape = 's32[1]{0}', space=sflag, size = 0x4, scoped, tag = 'scoped memory for tpu_custom_call.1']
    #allocation7 [shape = 'u8[8192]{0}', space=vmem, size = 0x2000, scoped, tag = 'output window, operand 0, single buffered']
    %11 = vsyncpa [#allocation3], 0
    %12 = vsyncpa [#allocation6], 0
    %13 = vsyncpa [#allocation4], 0
    // Predicated region
    $region2: #{tpu_custom_call.1} parent=1 // pred_check
      _
    $region3: #{tpu_custom_call.1} parent=1 // pred_check_branch
      %15 = sbr.rel (0) target = $region5
    $region4: #{tpu_custom_call.1} parent=1 // pred_region
      %s17 = ssub.s32 256, 256
      %18 = vsyncadd [#allocation3], %s17
      %s20 = sshll.u32 [#allocation2], 4
      %s21 = int_to_ptr.vmem [resolvable:$true] %s20
      %23 = dma.hbm_to_vmem [thread:$0]  %s0, 256, %s21, [#allocation3]
    $region5: #{tpu_custom_call.1} parent=1 // pred_fallthru
      _
    // Predicated region
    $region6: #{tpu_custom_call.1} parent=1 // pred_check
      _
    $region7: #{tpu_custom_call.1} parent=1 // pred_check_branch
      %25 = sbr.rel (0) target = $region9
    $region8: #{tpu_custom_call.1} parent=1 // pred_region
      _
    $region9: #{tpu_custom_call.1} parent=1 // pred_fallthru
      _
    // Predicated region
    $region10: #{tpu_custom_call.1} parent=1 // pred_check
      _
    $region11: #{tpu_custom_call.1} parent=1 // pred_check_branch
      %27 = sbr.rel (0) target = $region13
    $region12: #{tpu_custom_call.1} parent=1 // pred_region
      %s29 = ssub.s32 256, 256
      %30 = vsyncadd [#allocation6], %s29
      %s31 = sshll.u32 [#allocation5], 4
      %s32 = int_to_ptr.vmem [resolvable:$true] %s31
      %37 = dma.hbm_to_vmem [thread:$0]  %s2, 256, %s32, [#allocation6], 128, 128, 8
    $region13: #{tpu_custom_call.1} parent=1 // pred_fallthru
      _
    // Predicated region
    $region14: #{tpu_custom_call.1} parent=1 // pred_check
      _
    $region15: #{tpu_custom_call.1} parent=1 // pred_check_branch
      %39 = sbr.rel (0) target = $region17
    $region16: #{tpu_custom_call.1} parent=1 // pred_region
      _
    $region17: #{tpu_custom_call.1} parent=1 // pred_fallthru
      _
    // Predicated region
    $region18: #{tpu_custom_call.1} parent=1 // pred_check
      _
    $region19: #{tpu_custom_call.1} parent=1 // pred_check_branch
      %41 = sbr.rel (0) target = $region21
    $region20: #{tpu_custom_call.1} parent=1 // pred_region
      _
    $region21: #{tpu_custom_call.1} parent=1 // pred_fallthru
      _
    // Predicated region
    $region22: #{tpu_custom_call.1} parent=1 // pred_check
      _
    $region23: #{tpu_custom_call.1} parent=1 // pred_check_branch
      %43 = sbr.rel (0) target = $region25
    $region24: #{tpu_custom_call.1} parent=1 // pred_region
      _
    $region25: #{tpu_custom_call.1} parent=1 // pred_fallthru
      _
    // Predicated region
    $region26: #{tpu_custom_call.1} parent=1 // pred_check
      _
    $region27: #{tpu_custom_call.1} parent=1 // pred_check_branch
      %45 = sbr.rel (0) target = $region29
    $region28: #{tpu_custom_call.1} parent=1 // pred_region
      %46 = dma.done [#allocation3], 256
    $region29: #{tpu_custom_call.1} parent=1 // pred_fallthru
      _
    // Predicated region
    $region30: #{tpu_custom_call.1} parent=1 // pred_check
      _
    $region31: #{tpu_custom_call.1} parent=1 // pred_check_branch
      %48 = sbr.rel (0) target = $region33
    $region32: #{tpu_custom_call.1} parent=1 // pred_region
      %49 = dma.done [#allocation6], 256
    $region33: #{tpu_custom_call.1} parent=1 // pred_fallthru
      _
    %v50 = vld [vmem:[#allocation2] sm:$0xff]
    %v51 = vld [vmem:[#allocation2 + $0x8] sm:$0xff]
    %v52 = vld [vmem:[%s1] sm:$0xff]
    %v53 = vld [vmem:[%s1 + $0x8] sm:$0xff]
    %v54 = vlaneseq
    %v55 = vshrl.u32 %v54, 7
    %v56 = vsub.s32 0, %v55
    %v57 = vrot.slane %v50, %v56
    %v58 = vlaneseq
    %v59 = vshrl.u32 %v58, 7
    %v60 = vsub.s32 0, %v59
    %v61 = vrot.slane %v51, %v60
    %63 = vset.pattern.permute.xlu0 0
    %64 = vperm.xlu0 %63, %v52
    %v65 = vpop.permute.xlu0 %64
    %68 = vset.pattern.permute.xlu0 0
    %69 = vperm.xlu0 %68, %v53
    %v70 = vpop.permute.xlu0 %69
    %v72 = vmul.f32 %v57, %v65
    %v73 = vmul.f32 %v61, %v65
    %v74 = vmul.f32 %v57, %v70
    %v75 = vmul.f32 %v61, %v70
    %v76 = vlaneseq
    %v77 = vshrl.u32 %v76, 7
    %v78 = vsub.s32 1, %v77
    %v79 = vrot.slane %v50, %v78
    %v80 = vlaneseq
    %v81 = vshrl.u32 %v80, 7
    %v82 = vsub.s32 1, %v81
    %v83 = vrot.slane %v51, %v82
    %84 = vset.pattern.permute.xlu0 1
    %85 = vperm.xlu0 %84, %v52
    %v86 = vpop.permute.xlu0 %85
    %88 = vset.pattern.permute.xlu0 1
    %89 = vperm.xlu0 %88, %v53
    %v90 = vpop.permute.xlu0 %89
    %v92 = vmul.f32 %v79, %v86
    %v93 = vmul.f32 %v83, %v86
    %v94 = vmul.f32 %v79, %v90
    %v95 = vmul.f32 %v83, %v90
    %v96 = vadd.f32 %v72, %v92
    %v97 = vadd.f32 %v73, %v93
    %v98 = vadd.f32 %v74, %v94
    %v99 = vadd.f32 %v75, %v95
    %v100 = vlaneseq
    %v101 = vshrl.u32 %v100, 7
    %v102 = vsub.s32 2, %v101
    %v103 = vrot.slane %v50, %v102
    %v104 = vlaneseq
    %v105 = vshrl.u32 %v104, 7
    %v106 = vsub.s32 2, %v105
    %v107 = vrot.slane %v51, %v106
    %108 = vset.pattern.permute.xlu0 2
    %109 = vperm.xlu0 %108, %v52
    %v110 = vpop.permute.xlu0 %109
    %112 = vset.pattern.permute.xlu0 2
    %113 = vperm.xlu0 %112, %v53
    %v114 = vpop.permute.xlu0 %113
    %v116 = vmul.f32 %v103, %v110
    %v117 = vmul.f32 %v107, %v110
    %v118 = vmul.f32 %v103, %v114
    %v119 = vmul.f32 %v107, %v114
    %v120 = vadd.f32 %v96, %v116
    %v121 = vadd.f32 %v97, %v117
    %v122 = vadd.f32 %v98, %v118
    %v123 = vadd.f32 %v99, %v119
    %v124 = vlaneseq
    %v125 = vshrl.u32 %v124, 7
    %v126 = vsub.s32 3, %v125
    %v127 = vrot.slane %v50, %v126
    %v128 = vlaneseq
    %v129 = vshrl.u32 %v128, 7
    %v130 = vsub.s32 3, %v129
    %v131 = vrot.slane %v51, %v130
    %132 = vset.pattern.permute.xlu0 3
    %133 = vperm.xlu0 %132, %v52
    %v134 = vpop.permute.xlu0 %133
    %136 = vset.pattern.permute.xlu0 3
    %137 = vperm.xlu0 %136, %v53
    %v138 = vpop.permute.xlu0 %137
    %v140 = vmul.f32 %v127, %v134
    %v141 = vmul.f32 %v131, %v134
    %v142 = vmul.f32 %v127, %v138
    %v143 = vmul.f32 %v131, %v138
    %v144 = vadd.f32 %v120, %v140
    %v145 = vadd.f32 %v121, %v141
    %v146 = vadd.f32 %v122, %v142
    %v147 = vadd.f32 %v123, %v143
    %v148 = vlaneseq
    %v149 = vshrl.u32 %v148, 7
    %v150 = vsub.s32 4, %v149
    %v151 = vrot.slane %v50, %v150
    %v152 = vlaneseq
    %v153 = vshrl.u32 %v152, 7
    %v154 = vsub.s32 4, %v153
    %v155 = vrot.slane %v51, %v154
    %156 = vset.pattern.permute.xlu0 4
    %157 = vperm.xlu0 %156, %v52
    %v158 = vpop.permute.xlu0 %157
    %160 = vset.pattern.permute.xlu0 4
    %161 = vperm.xlu0 %160, %v53
    %v162 = vpop.permute.xlu0 %161
    %v164 = vmul.f32 %v151, %v158
    %v165 = vmul.f32 %v155, %v158
    %v166 = vmul.f32 %v151, %v162
    %v167 = vmul.f32 %v155, %v162
    %v168 = vadd.f32 %v144, %v164
    %v169 = vadd.f32 %v145, %v165
    %v170 = vadd.f32 %v146, %v166
    %v171 = vadd.f32 %v147, %v167
    %v172 = vlaneseq
    %v173 = vshrl.u32 %v172, 7
    %v174 = vsub.s32 5, %v173
    %v175 = vrot.slane %v50, %v174
    %v176 = vlaneseq
    %v177 = vshrl.u32 %v176, 7
    %v178 = vsub.s32 5, %v177
    %v179 = vrot.slane %v51, %v178
    %180 = vset.pattern.permute.xlu0 5
    %181 = vperm.xlu0 %180, %v52
    %v182 = vpop.permute.xlu0 %181
    %184 = vset.pattern.permute.xlu0 5
    %185 = vperm.xlu0 %184, %v53
    %v186 = vpop.permute.xlu0 %185
    %v188 = vmul.f32 %v175, %v182
    %v189 = vmul.f32 %v179, %v182
    %v190 = vmul.f32 %v175, %v186
    %v191 = vmul.f32 %v179, %v186
    %v192 = vadd.f32 %v168, %v188
    %v193 = vadd.f32 %v169, %v189
    %v194 = vadd.f32 %v170, %v190
    %v195 = vadd.f32 %v171, %v191
    %v196 = vlaneseq
    %v197 = vshrl.u32 %v196, 7
    %v198 = vsub.s32 6, %v197
    %v199 = vrot.slane %v50, %v198
    %v200 = vlaneseq
    %v201 = vshrl.u32 %v200, 7
    %v202 = vsub.s32 6, %v201
    %v203 = vrot.slane %v51, %v202
    %204 = vset.pattern.permute.xlu0 6
    %205 = vperm.xlu0 %204, %v52
    %v206 = vpop.permute.xlu0 %205
    %208 = vset.pattern.permute.xlu0 6
    %209 = vperm.xlu0 %208, %v53
    %v210 = vpop.permute.xlu0 %209
    %v212 = vmul.f32 %v199, %v206
    %v213 = vmul.f32 %v203, %v206
    %v214 = vmul.f32 %v199, %v210
    %v215 = vmul.f32 %v203, %v210
    %v216 = vadd.f32 %v192, %v212
    %v217 = vadd.f32 %v193, %v213
    %v218 = vadd.f32 %v194, %v214
    %v219 = vadd.f32 %v195, %v215
    %v220 = vlaneseq
    %v221 = vshrl.u32 %v220, 7
    %v222 = vsub.s32 7, %v221
    %v223 = vrot.slane %v50, %v222
    %v224 = vlaneseq
    %v225 = vshrl.u32 %v224, 7
    %v226 = vsub.s32 7, %v225
    %v227 = vrot.slane %v51, %v226
    %228 = vset.pattern.permute.xlu0 7
    %229 = vperm.xlu0 %228, %v52
    %v230 = vpop.permute.xlu0 %229
    %232 = vset.pattern.permute.xlu0 7
    %233 = vperm.xlu0 %232, %v53
    %v234 = vpop.permute.xlu0 %233
    %v236 = vmul.f32 %v223, %v230
    %v237 = vmul.f32 %v227, %v230
    %v238 = vmul.f32 %v223, %v234
    %v239 = vmul.f32 %v227, %v234
    %v240 = vadd.f32 %v216, %v236
    %v241 = vadd.f32 %v217, %v237
    %v242 = vadd.f32 %v218, %v238
    %v243 = vadd.f32 %v219, %v239
    %vm244 = vcmp.ge.f32.partialorder %v240, 0.0
    %vm245 = vcmp.ge.f32.partialorder %v241, 0.0
    %vm246 = vcmp.ge.f32.partialorder %v242, 0.0
    %vm247 = vcmp.ge.f32.partialorder %v243, 0.0
    %v248 = vmul.f32 %v240, 0.5
    %v249 = vmul.f32 %v241, 0.5
    %v250 = vmul.f32 %v242, 0.5
    %v251 = vmul.f32 %v243, 0.5
    %v252 = vsel %vm244, %v240, %v248
    %v253 = vsel %vm245, %v241, %v249
    %v254 = vsel %vm246, %v242, %v250
    %v255 = vsel %vm247, %v243, %v251
    %v256 = vld [vmem:[#allocation5] sm:$0xff]
    %v257 = vld [vmem:[#allocation5 + $0x8] sm:$0xff]
    %v258 = vld [vmem:[%s3] sm:$0xff]
    %v259 = vld [vmem:[%s3 + $0x8] sm:$0xff]
    %v260 = vld [vmem:[%s3 + $0x10] sm:$0x1]
    %v261 = vld [vmem:[%s3 + $0x18] sm:$0x1]
    %263 = vset.pattern.permute.xlu0 4
    %264 = vperm.xlu0 %263, %v256
    %v265 = vpop.permute.xlu0 %264
    %268 = vset.pattern.permute.xlu0 4
    %269 = vperm.xlu0 %268, %v257
    %v270 = vpop.permute.xlu0 %269
    %v272 = vmul.f32 %v252, %v265
    %v273 = vmul.f32 %v253, %v265
    %v274 = vmul.f32 %v254, %v270
    %v275 = vmul.f32 %v255, %v270
    %v276 = vld [vmem:[%s4] sm:$0xff]
    %v277 = vld [vmem:[%s4 + $0x8] sm:$0xff]
    %279 = vset.pattern.permute.xlu0 0
    %280 = vperm.xlu0 %279, %v276
    %v281 = vpop.permute.xlu0 %280
    %284 = vset.pattern.permute.xlu0 0
    %285 = vperm.xlu0 %284, %v277
    %v286 = vpop.permute.xlu0 %285
    %v288 = vadd.f32 %v272, %v281
    %v289 = vadd.f32 %v273, %v281
    %v290 = vadd.f32 %v274, %v286
    %v291 = vadd.f32 %v275, %v286
    %292 = vrot.lane.b32.xlu0 %v252, 17
    %v293 = vpop.permute.xlu0 %292
    %294 = vrot.lane.b32.xlu0 %v254, 17
    %v295 = vpop.permute.xlu0 %294
    %296 = vrot.lane.b32.xlu0 %v253, 17
    %v297 = vpop.permute.xlu0 %296
    %298 = vrot.lane.b32.xlu0 %v255, 17
    %v299 = vpop.permute.xlu0 %298
    %v300 = vlaneseq
    %v301 = vand.u32 %v300, 127
    %vm302 = vcmp.lt.s32.totalorder %v301, 17
    %v303 = vsel %vm302, %v293, %v297
    %v304 = vsel %vm302, %v295, %v299
    %v305 = vsel %vm302, %v297, %v293
    %v306 = vsel %vm302, %v299, %v295
    %v307 = vlaneseq
    %v308 = vshrl.u32 %v307, 7
    %v309 = vsub.s32 0, %v308
    %v310 = vrot.slane %v258, %v309
    %v311 = vlaneseq
    %v312 = vshrl.u32 %v311, 7
    %v313 = vsub.s32 0, %v312
    %v314 = vrot.slane %v259, %v313
    %v315 = vmul.f32 %v305, %v310
    %v316 = vmul.f32 %v303, %v314
    %v317 = vmul.f32 %v306, %v310
    %v318 = vmul.f32 %v304, %v314
    %319 = vset.pattern.permute.xlu0 0
    %320 = vperm.xlu0 %319, %v256
    %v321 = vpop.permute.xlu0 %320
    %323 = vset.pattern.permute.xlu0 0
    %324 = vperm.xlu0 %323, %v257
    %v325 = vpop.permute.xlu0 %324
    %v327 = vmul.f32 %v315, %v321
    %v328 = vmul.f32 %v316, %v321
    %v329 = vmul.f32 %v317, %v325
    %v330 = vmul.f32 %v318, %v325
    %v331 = vadd.f32 %v288, %v327
    %v332 = vadd.f32 %v289, %v328
    %v333 = vadd.f32 %v290, %v329
    %v334 = vadd.f32 %v291, %v330
    %335 = vrot.lane.b32.xlu0 %v252, 16
    %v336 = vpop.permute.xlu0 %335
    %337 = vrot.lane.b32.xlu0 %v254, 16
    %v338 = vpop.permute.xlu0 %337
    %339 = vrot.lane.b32.xlu0 %v253, 16
    %v340 = vpop.permute.xlu0 %339
    %341 = vrot.lane.b32.xlu0 %v255, 16
    %v342 = vpop.permute.xlu0 %341
    %vm343 = vcmp.lt.s32.totalorder %v301, 16
    %v344 = vsel %vm343, %v336, %v340
    %v345 = vsel %vm343, %v338, %v342
    %v346 = vsel %vm343, %v340, %v336
    %v347 = vsel %vm343, %v342, %v338
    %v348 = vlaneseq
    %v349 = vshrl.u32 %v348, 7
    %v350 = vsub.s32 1, %v349
    %v351 = vrot.slane %v258, %v350
    %v352 = vlaneseq
    %v353 = vshrl.u32 %v352, 7
    %v354 = vsub.s32 1, %v353
    %v355 = vrot.slane %v259, %v354
    %v356 = vmul.f32 %v346, %v351
    %v357 = vmul.f32 %v344, %v355
    %v358 = vmul.f32 %v347, %v351
    %v359 = vmul.f32 %v345, %v355
    %360 = vset.pattern.permute.xlu0 1
    %361 = vperm.xlu0 %360, %v256
    %v362 = vpop.permute.xlu0 %361
    %364 = vset.pattern.permute.xlu0 1
    %365 = vperm.xlu0 %364, %v257
    %v366 = vpop.permute.xlu0 %365
    %v368 = vmul.f32 %v356, %v362
    %v369 = vmul.f32 %v357, %v362
    %v370 = vmul.f32 %v358, %v366
    %v371 = vmul.f32 %v359, %v366
    %v372 = vadd.f32 %v331, %v368
    %v373 = vadd.f32 %v332, %v369
    %v374 = vadd.f32 %v333, %v370
    %v375 = vadd.f32 %v334, %v371
    %376 = vrot.lane.b32.xlu0 %v252, 15
    %v377 = vpop.permute.xlu0 %376
    %378 = vrot.lane.b32.xlu0 %v254, 15
    %v379 = vpop.permute.xlu0 %378
    %380 = vrot.lane.b32.xlu0 %v253, 15
    %v381 = vpop.permute.xlu0 %380
    %382 = vrot.lane.b32.xlu0 %v255, 15
    %v383 = vpop.permute.xlu0 %382
    %vm384 = vcmp.lt.s32.totalorder %v301, 15
    %v385 = vsel %vm384, %v377, %v381
    %v386 = vsel %vm384, %v379, %v383
    %v387 = vsel %vm384, %v381, %v377
    %v388 = vsel %vm384, %v383, %v379
    %v389 = vlaneseq
    %v390 = vshrl.u32 %v389, 7
    %v391 = vsub.s32 2, %v390
    %v392 = vrot.slane %v258, %v391
    %v393 = vlaneseq
    %v394 = vshrl.u32 %v393, 7
    %v395 = vsub.s32 2, %v394
    %v396 = vrot.slane %v259, %v395
    %v397 = vmul.f32 %v387, %v392
    %v398 = vmul.f32 %v385, %v396
    %v399 = vmul.f32 %v388, %v392
    %v400 = vmul.f32 %v386, %v396
    %401 = vset.pattern.permute.xlu0 2
    %402 = vperm.xlu0 %401, %v256
    %v403 = vpop.permute.xlu0 %402
    %405 = vset.pattern.permute.xlu0 2
    %406 = vperm.xlu0 %405, %v257
    %v407 = vpop.permute.xlu0 %406
    %v409 = vmul.f32 %v397, %v403
    %v410 = vmul.f32 %v398, %v403
    %v411 = vmul.f32 %v399, %v407
    %v412 = vmul.f32 %v400, %v407
    %v413 = vadd.f32 %v372, %v409
    %v414 = vadd.f32 %v373, %v410
    %v415 = vadd.f32 %v374, %v411
    %v416 = vadd.f32 %v375, %v412
    %417 = vrot.lane.b32.xlu0 %v252, 1
    %v418 = vpop.permute.xlu0 %417
    %419 = vrot.lane.b32.xlu0 %v254, 1
    %v420 = vpop.permute.xlu0 %419
    %421 = vrot.lane.b32.xlu0 %v253, 1
    %v422 = vpop.permute.xlu0 %421
    %423 = vrot.lane.b32.xlu0 %v255, 1
    %v424 = vpop.permute.xlu0 %423
    %vm425 = vcmp.lt.s32.totalorder %v301, 1
    %v426 = vsel %vm425, %v418, %v422
    %v427 = vsel %vm425, %v420, %v424
    %v428 = vsel %vm425, %v422, %v418
    %v429 = vsel %vm425, %v424, %v420
    %v430 = vlaneseq
    %v431 = vshrl.u32 %v430, 7
    %v432 = vsub.s32 3, %v431
    %v433 = vrot.slane %v258, %v432
    %v434 = vlaneseq
    %v435 = vshrl.u32 %v434, 7
    %v436 = vsub.s32 3, %v435
    %v437 = vrot.slane %v259, %v436
    %v438 = vmul.f32 %v428, %v433
    %v439 = vmul.f32 %v426, %v437
    %v440 = vmul.f32 %v429, %v433
    %v441 = vmul.f32 %v427, %v437
    %442 = vset.pattern.permute.xlu0 3
    %443 = vperm.xlu0 %442, %v256
    %v444 = vpop.permute.xlu0 %443
    %446 = vset.pattern.permute.xlu0 3
    %447 = vperm.xlu0 %446, %v257
    %v448 = vpop.permute.xlu0 %447
    %v450 = vmul.f32 %v438, %v444
    %v451 = vmul.f32 %v439, %v444
    %v452 = vmul.f32 %v440, %v448
    %v453 = vmul.f32 %v441, %v448
    %v454 = vadd.f32 %v413, %v450
    %v455 = vadd.f32 %v414, %v451
    %v456 = vadd.f32 %v415, %v452
    %v457 = vadd.f32 %v416, %v453
    %458 = vrot.lane.b32.xlu0 %v252, 127
    %v459 = vpop.permute.xlu0 %458
    %460 = vrot.lane.b32.xlu0 %v254, 127
    %v461 = vpop.permute.xlu0 %460
    %462 = vrot.lane.b32.xlu0 %v253, 127
    %v463 = vpop.permute.xlu0 %462
    %464 = vrot.lane.b32.xlu0 %v255, 127
    %v465 = vpop.permute.xlu0 %464
    %vm466 = vcmp.lt.s32.totalorder %v301, 127
    %v467 = vsel %vm466, %v459, %v463
    %v468 = vsel %vm466, %v461, %v465
    %v469 = vsel %vm466, %v463, %v459
    %v470 = vsel %vm466, %v465, %v461
    %v471 = vlaneseq
    %v472 = vshrl.u32 %v471, 7
    %v473 = vsub.s32 5, %v472
    %v474 = vrot.slane %v258, %v473
    %v475 = vlaneseq
    %v476 = vshrl.u32 %v475, 7
    %v477 = vsub.s32 5, %v476
    %v478 = vrot.slane %v259, %v477
    %v479 = vmul.f32 %v467, %v474
    %v480 = vmul.f32 %v469, %v478
    %v481 = vmul.f32 %v468, %v474
    %v482 = vmul.f32 %v470, %v478
    %483 = vset.pattern.permute.xlu0 5
    %484 = vperm.xlu0 %483, %v256
    %v485 = vpop.permute.xlu0 %484
    %487 = vset.pattern.permute.xlu0 5
    %488 = vperm.xlu0 %487, %v257
    %v489 = vpop.permute.xlu0 %488
    %v491 = vmul.f32 %v479, %v485
    %v492 = vmul.f32 %v480, %v485
    %v493 = vmul.f32 %v481, %v489
    %v494 = vmul.f32 %v482, %v489
    %v495 = vadd.f32 %v454, %v491
    %v496 = vadd.f32 %v455, %v492
    %v497 = vadd.f32 %v456, %v493
    %v498 = vadd.f32 %v457, %v494
    %499 = vrot.lane.b32.xlu0 %v252, 113
    %v500 = vpop.permute.xlu0 %499
    %501 = vrot.lane.b32.xlu0 %v254, 113
    %v502 = vpop.permute.xlu0 %501
    %503 = vrot.lane.b32.xlu0 %v253, 113
    %v504 = vpop.permute.xlu0 %503
    %505 = vrot.lane.b32.xlu0 %v255, 113
    %v506 = vpop.permute.xlu0 %505
    %vm507 = vcmp.lt.s32.totalorder %v301, 113
    %v508 = vsel %vm507, %v500, %v504
    %v509 = vsel %vm507, %v502, %v506
    %v510 = vsel %vm507, %v504, %v500
    %v511 = vsel %vm507, %v506, %v502
    %v512 = vlaneseq
    %v513 = vshrl.u32 %v512, 7
    %v514 = vsub.s32 6, %v513
    %v515 = vrot.slane %v258, %v514
    %v516 = vlaneseq
    %v517 = vshrl.u32 %v516, 7
    %v518 = vsub.s32 6, %v517
    %v519 = vrot.slane %v259, %v518
    %v520 = vmul.f32 %v508, %v515
    %v521 = vmul.f32 %v510, %v519
    %v522 = vmul.f32 %v509, %v515
    %v523 = vmul.f32 %v511, %v519
    %524 = vset.pattern.permute.xlu0 6
    %525 = vperm.xlu0 %524, %v256
    %v526 = vpop.permute.xlu0 %525
    %528 = vset.pattern.permute.xlu0 6
    %529 = vperm.xlu0 %528, %v257
    %v530 = vpop.permute.xlu0 %529
    %v532 = vmul.f32 %v520, %v526
    %v533 = vmul.f32 %v521, %v526
    %v534 = vmul.f32 %v522, %v530
    %v535 = vmul.f32 %v523, %v530
    %v536 = vadd.f32 %v495, %v532
    %v537 = vadd.f32 %v496, %v533
    %v538 = vadd.f32 %v497, %v534
    %v539 = vadd.f32 %v498, %v535
    %540 = vrot.lane.b32.xlu0 %v252, 112
    %v541 = vpop.permute.xlu0 %540
    %542 = vrot.lane.b32.xlu0 %v254, 112
    %v543 = vpop.permute.xlu0 %542
    %544 = vrot.lane.b32.xlu0 %v253, 112
    %v545 = vpop.permute.xlu0 %544
    %546 = vrot.lane.b32.xlu0 %v255, 112
    %v547 = vpop.permute.xlu0 %546
    %vm548 = vcmp.lt.s32.totalorder %v301, 112
    %v549 = vsel %vm548, %v541, %v545
    %v550 = vsel %vm548, %v543, %v547
    %v551 = vsel %vm548, %v545, %v541
    %v552 = vsel %vm548, %v547, %v543
    %v553 = vlaneseq
    %v554 = vshrl.u32 %v553, 7
    %v555 = vsub.s32 7, %v554
    %v556 = vrot.slane %v258, %v555
    %v557 = vlaneseq
    %v558 = vshrl.u32 %v557, 7
    %v559 = vsub.s32 7, %v558
    %v560 = vrot.slane %v259, %v559
    %v561 = vmul.f32 %v549, %v556
    %v562 = vmul.f32 %v551, %v560
    %v563 = vmul.f32 %v550, %v556
    %v564 = vmul.f32 %v552, %v560
    %565 = vset.pattern.permute.xlu0 7
    %566 = vperm.xlu0 %565, %v256
    %v567 = vpop.permute.xlu0 %566
    %569 = vset.pattern.permute.xlu0 7
    %570 = vperm.xlu0 %569, %v257
    %v571 = vpop.permute.xlu0 %570
    %v573 = vmul.f32 %v561, %v567
    %v574 = vmul.f32 %v562, %v567
    %v575 = vmul.f32 %v563, %v571
    %v576 = vmul.f32 %v564, %v571
    %v577 = vadd.f32 %v536, %v573
    %v578 = vadd.f32 %v537, %v574
    %v579 = vadd.f32 %v538, %v575
    %v580 = vadd.f32 %v539, %v576
    %581 = vrot.lane.b32.xlu0 %v252, 111
    %v582 = vpop.permute.xlu0 %581
    %583 = vrot.lane.b32.xlu0 %v254, 111
    %v584 = vpop.permute.xlu0 %583
    %585 = vrot.lane.b32.xlu0 %v253, 111
    %v586 = vpop.permute.xlu0 %585
    %587 = vrot.lane.b32.xlu0 %v255, 111
    %v588 = vpop.permute.xlu0 %587
    %vm589 = vcmp.lt.s32.totalorder %v301, 111
    %v590 = vsel %vm589, %v582, %v586
    %v591 = vsel %vm589, %v584, %v588
    %v592 = vsel %vm589, %v586, %v582
    %v593 = vsel %vm589, %v588, %v584
    %v594 = vlaneseq
    %v595 = vshrl.u32 %v594, 7
    %v596 = vsub.s32 0, %v595
    %v597 = vrot.slane %v260, %v596
    %v598 = vlaneseq
    %v599 = vshrl.u32 %v598, 7
    %v600 = vsub.s32 0, %v599
    %v601 = vrot.slane %v261, %v600
    %v602 = vmul.f32 %v590, %v597
    %v603 = vmul.f32 %v592, %v601
    %v604 = vmul.f32 %v591, %v597
    %v605 = vmul.f32 %v593, %v601
    %606 = vset.pattern.permute.xlu0 8
    %607 = vperm.xlu0 %606, %v256
    %v608 = vpop.permute.xlu0 %607
    %610 = vset.pattern.permute.xlu0 8
    %611 = vperm.xlu0 %610, %v257
    %v612 = vpop.permute.xlu0 %611
    %v614 = vmul.f32 %v602, %v608
    %v615 = vmul.f32 %v603, %v608
    %v616 = vmul.f32 %v604, %v612
    %v617 = vmul.f32 %v605, %v612
    %v618 = vadd.f32 %v577, %v614
    %v619 = vadd.f32 %v578, %v615
    %v620 = vadd.f32 %v579, %v616
    %v621 = vadd.f32 %v580, %v617
    %vm622 = vcmp.ge.f32.partialorder %v618, 0.0
    %vm623 = vcmp.ge.f32.partialorder %v619, 0.0
    %vm624 = vcmp.ge.f32.partialorder %v620, 0.0
    %vm625 = vcmp.ge.f32.partialorder %v621, 0.0
    %v626 = vmul.f32 %v618, 0.2
    %v627 = vmul.f32 %v619, 0.2
    %v628 = vmul.f32 %v620, 0.2
    %v629 = vmul.f32 %v621, 0.2
    %v630 = vsel %vm622, %v618, %v626
    %v631 = vsel %vm623, %v619, %v627
    %v632 = vsel %vm624, %v620, %v628
    %v633 = vsel %vm625, %v621, %v629
    %v634 = vld [vmem:[%s5] sm:$0xff]
    %v635 = vlaneseq
    %v636 = vshrl.u32 %v635, 7
    %v637 = vsub.s32 0, %v636
    %v638 = vrot.slane %v630, %v637
    %v639 = vlaneseq
    %v640 = vshrl.u32 %v639, 7
    %v641 = vsub.s32 0, %v640
    %v642 = vrot.slane %v631, %v641
    %644 = vset.pattern.permute.xlu0 0
    %645 = vperm.xlu0 %644, %v634
    %v646 = vpop.permute.xlu0 %645
    %v648 = vmul.f32 %v638, %v646
    %v649 = vmul.f32 %v642, %v646
    %v650 = vadd.f32 %v50, %v648
    %v651 = vadd.f32 %v51, %v649
    %v652 = vlaneseq
    %v653 = vshrl.u32 %v652, 7
    %v654 = vsub.s32 1, %v653
    %v655 = vrot.slane %v630, %v654
    %v656 = vlaneseq
    %v657 = vshrl.u32 %v656, 7
    %v658 = vsub.s32 1, %v657
    %v659 = vrot.slane %v631, %v658
    %660 = vset.pattern.permute.xlu0 1
    %661 = vperm.xlu0 %660, %v634
    %v662 = vpop.permute.xlu0 %661
    %v664 = vmul.f32 %v655, %v662
    %v665 = vmul.f32 %v659, %v662
    %v666 = vadd.f32 %v650, %v664
    %v667 = vadd.f32 %v651, %v665
    %v668 = vlaneseq
    %v669 = vshrl.u32 %v668, 7
    %v670 = vsub.s32 2, %v669
    %v671 = vrot.slane %v630, %v670
    %v672 = vlaneseq
    %v673 = vshrl.u32 %v672, 7
    %v674 = vsub.s32 2, %v673
    %v675 = vrot.slane %v631, %v674
    %676 = vset.pattern.permute.xlu0 2
    %677 = vperm.xlu0 %676, %v634
    %v678 = vpop.permute.xlu0 %677
    %v680 = vmul.f32 %v671, %v678
    %v681 = vmul.f32 %v675, %v678
    %v682 = vadd.f32 %v666, %v680
    %v683 = vadd.f32 %v667, %v681
    %v684 = vlaneseq
    %v685 = vshrl.u32 %v684, 7
    %v686 = vsub.s32 3, %v685
    %v687 = vrot.slane %v630, %v686
    %v688 = vlaneseq
    %v689 = vshrl.u32 %v688, 7
    %v690 = vsub.s32 3, %v689
    %v691 = vrot.slane %v631, %v690
    %692 = vset.pattern.permute.xlu0 3
    %693 = vperm.xlu0 %692, %v634
    %v694 = vpop.permute.xlu0 %693
    %v696 = vmul.f32 %v687, %v694
    %v697 = vmul.f32 %v691, %v694
    %v698 = vadd.f32 %v682, %v696
    %v699 = vadd.f32 %v683, %v697
    %v700 = vlaneseq
    %v701 = vshrl.u32 %v700, 7
    %v702 = vsub.s32 4, %v701
    %v703 = vrot.slane %v630, %v702
    %v704 = vlaneseq
    %v705 = vshrl.u32 %v704, 7
    %v706 = vsub.s32 4, %v705
    %v707 = vrot.slane %v631, %v706
    %708 = vset.pattern.permute.xlu0 4
    %709 = vperm.xlu0 %708, %v634
    %v710 = vpop.permute.xlu0 %709
    %v712 = vmul.f32 %v703, %v710
    %v713 = vmul.f32 %v707, %v710
    %v714 = vadd.f32 %v698, %v712
    %v715 = vadd.f32 %v699, %v713
    %v716 = vlaneseq
    %v717 = vshrl.u32 %v716, 7
    %v718 = vsub.s32 5, %v717
    %v719 = vrot.slane %v630, %v718
    %v720 = vlaneseq
    %v721 = vshrl.u32 %v720, 7
    %v722 = vsub.s32 5, %v721
    %v723 = vrot.slane %v631, %v722
    %724 = vset.pattern.permute.xlu0 5
    %725 = vperm.xlu0 %724, %v634
    %v726 = vpop.permute.xlu0 %725
    %v728 = vmul.f32 %v719, %v726
    %v729 = vmul.f32 %v723, %v726
    %v730 = vadd.f32 %v714, %v728
    %v731 = vadd.f32 %v715, %v729
    %v732 = vlaneseq
    %v733 = vshrl.u32 %v732, 7
    %v734 = vsub.s32 6, %v733
    %v735 = vrot.slane %v630, %v734
    %v736 = vlaneseq
    %v737 = vshrl.u32 %v736, 7
    %v738 = vsub.s32 6, %v737
    %v739 = vrot.slane %v631, %v738
    %740 = vset.pattern.permute.xlu0 6
    %741 = vperm.xlu0 %740, %v634
    %v742 = vpop.permute.xlu0 %741
    %v744 = vmul.f32 %v735, %v742
    %v745 = vmul.f32 %v739, %v742
    %v746 = vadd.f32 %v730, %v744
    %v747 = vadd.f32 %v731, %v745
    %v748 = vlaneseq
    %v749 = vshrl.u32 %v748, 7
    %v750 = vsub.s32 7, %v749
    %v751 = vrot.slane %v630, %v750
    %v752 = vlaneseq
    %v753 = vshrl.u32 %v752, 7
    %v754 = vsub.s32 7, %v753
    %v755 = vrot.slane %v631, %v754
    %756 = vset.pattern.permute.xlu0 7
    %757 = vperm.xlu0 %756, %v634
    %v758 = vpop.permute.xlu0 %757
    %v760 = vmul.f32 %v751, %v758
    %v761 = vmul.f32 %v755, %v758
    %v762 = vadd.f32 %v746, %v760
    %v763 = vadd.f32 %v747, %v761
    %v764 = vlaneseq
    %v765 = vshrl.u32 %v764, 7
    %v766 = vsub.s32 0, %v765
    %v767 = vrot.slane %v632, %v766
    %v768 = vlaneseq
    %v769 = vshrl.u32 %v768, 7
    %v770 = vsub.s32 0, %v769
    %v771 = vrot.slane %v633, %v770
    %772 = vset.pattern.permute.xlu0 8
    %773 = vperm.xlu0 %772, %v634
    %v774 = vpop.permute.xlu0 %773
    %v776 = vmul.f32 %v767, %v774
    %v777 = vmul.f32 %v771, %v774
    %v778 = vadd.f32 %v762, %v776
    %v779 = vadd.f32 %v763, %v777
    %v780 = vlaneseq
    %v781 = vshrl.u32 %v780, 7
    %v782 = vsub.s32 1, %v781
    %v783 = vrot.slane %v632, %v782
    %v784 = vlaneseq
    %v785 = vshrl.u32 %v784, 7
    %v786 = vsub.s32 1, %v785
    %v787 = vrot.slane %v633, %v786
    %788 = vset.pattern.permute.xlu0 9
    %789 = vperm.xlu0 %788, %v634
    %v790 = vpop.permute.xlu0 %789
    %v792 = vmul.f32 %v783, %v790
    %v793 = vmul.f32 %v787, %v790
    %v794 = vadd.f32 %v778, %v792
    %v795 = vadd.f32 %v779, %v793
    %v796 = vlaneseq
    %v797 = vshrl.u32 %v796, 7
    %v798 = vsub.s32 2, %v797
    %v799 = vrot.slane %v632, %v798
    %v800 = vlaneseq
    %v801 = vshrl.u32 %v800, 7
    %v802 = vsub.s32 2, %v801
    %v803 = vrot.slane %v633, %v802
    %804 = vset.pattern.permute.xlu0 10
    %805 = vperm.xlu0 %804, %v634
    %v806 = vpop.permute.xlu0 %805
    %v808 = vmul.f32 %v799, %v806
    %v809 = vmul.f32 %v803, %v806
    %v810 = vadd.f32 %v794, %v808
    %v811 = vadd.f32 %v795, %v809
    %v812 = vlaneseq
    %v813 = vshrl.u32 %v812, 7
    %v814 = vsub.s32 3, %v813
    %v815 = vrot.slane %v632, %v814
    %v816 = vlaneseq
    %v817 = vshrl.u32 %v816, 7
    %v818 = vsub.s32 3, %v817
    %v819 = vrot.slane %v633, %v818
    %820 = vset.pattern.permute.xlu0 11
    %821 = vperm.xlu0 %820, %v634
    %v822 = vpop.permute.xlu0 %821
    %v824 = vmul.f32 %v815, %v822
    %v825 = vmul.f32 %v819, %v822
    %v826 = vadd.f32 %v810, %v824
    %v827 = vadd.f32 %v811, %v825
    %v828 = vlaneseq
    %v829 = vshrl.u32 %v828, 7
    %v830 = vsub.s32 4, %v829
    %v831 = vrot.slane %v632, %v830
    %v832 = vlaneseq
    %v833 = vshrl.u32 %v832, 7
    %v834 = vsub.s32 4, %v833
    %v835 = vrot.slane %v633, %v834
    %836 = vset.pattern.permute.xlu0 12
    %837 = vperm.xlu0 %836, %v634
    %v838 = vpop.permute.xlu0 %837
    %v840 = vmul.f32 %v831, %v838
    %v841 = vmul.f32 %v835, %v838
    %v842 = vadd.f32 %v826, %v840
    %v843 = vadd.f32 %v827, %v841
    %v844 = vlaneseq
    %v845 = vshrl.u32 %v844, 7
    %v846 = vsub.s32 5, %v845
    %v847 = vrot.slane %v632, %v846
    %v848 = vlaneseq
    %v849 = vshrl.u32 %v848, 7
    %v850 = vsub.s32 5, %v849
    %v851 = vrot.slane %v633, %v850
    %852 = vset.pattern.permute.xlu0 13
    %853 = vperm.xlu0 %852, %v634
    %v854 = vpop.permute.xlu0 %853
    %v856 = vmul.f32 %v847, %v854
    %v857 = vmul.f32 %v851, %v854
    %v858 = vadd.f32 %v842, %v856
    %v859 = vadd.f32 %v843, %v857
    %v860 = vlaneseq
    %v861 = vshrl.u32 %v860, 7
    %v862 = vsub.s32 6, %v861
    %v863 = vrot.slane %v632, %v862
    %v864 = vlaneseq
    %v865 = vshrl.u32 %v864, 7
    %v866 = vsub.s32 6, %v865
    %v867 = vrot.slane %v633, %v866
    %868 = vset.pattern.permute.xlu0 14
    %869 = vperm.xlu0 %868, %v634
    %v870 = vpop.permute.xlu0 %869
    %v872 = vmul.f32 %v863, %v870
    %v873 = vmul.f32 %v867, %v870
    %v874 = vadd.f32 %v858, %v872
    %v875 = vadd.f32 %v859, %v873
    %v876 = vlaneseq
    %v877 = vshrl.u32 %v876, 7
    %v878 = vsub.s32 7, %v877
    %v879 = vrot.slane %v632, %v878
    %v880 = vlaneseq
    %v881 = vshrl.u32 %v880, 7
    %v882 = vsub.s32 7, %v881
    %v883 = vrot.slane %v633, %v882
    %884 = vset.pattern.permute.xlu0 15
    %885 = vperm.xlu0 %884, %v634
    %v886 = vpop.permute.xlu0 %885
    %v888 = vmul.f32 %v879, %v886
    %v889 = vmul.f32 %v883, %v886
    %v890 = vadd.f32 %v874, %v888
    %v891 = vadd.f32 %v875, %v889
    %892 = vst [vmem:[#allocation7] sm:$0xff] %v890
    %893 = vst [vmem:[#allocation7 + $0x8] sm:$0xff] %v891
    // Predicated region
    $region34: #{tpu_custom_call.1} parent=1 // pred_check
      _
    $region35: #{tpu_custom_call.1} parent=1 // pred_check_branch
      %895 = sbr.rel (0) target = $region37
    $region36: #{tpu_custom_call.1} parent=1 // pred_region
      %s897 = ssub.s32 256, 256
      %898 = vsyncadd [#allocation4], %s897
      %s900 = sshll.u32 [#allocation7], 4
      %s901 = int_to_ptr.vmem [resolvable:$true] %s900
      %903 = dma.vmem_to_hbm [thread:$0]  %s901, 256, %s6, [#allocation4]
    $region37: #{tpu_custom_call.1} parent=1 // pred_fallthru
      _
    // Predicated region
    $region38: #{tpu_custom_call.1} parent=1 // pred_check
      _
    $region39: #{tpu_custom_call.1} parent=1 // pred_check_branch
      %905 = sbr.rel (0) target = $region41
    $region40: #{tpu_custom_call.1} parent=1 // pred_region
      %906 = dma.done [#allocation4], 256
    $region41: #{tpu_custom_call.1} parent=1 // pred_fallthru
      _
    %907 = vsyncpa [#allocation3], 1
    %908 = vsyncpa [#allocation6], 1
    %909 = vsyncpa [#allocation4], 1

</llo_original>
